<compile_context>
chip_gen: v5e
topology: v5e:2x2
jax: 0.10.0
libtpu: 0.0.40
codegen_flags: <defaults>
</compile_context>

<pallas_src>
import functools

import jax
import jax.numpy as jnp
from jax.experimental import pallas as pl
from jax.experimental.pallas import tpu as pltpu

GCONV1 = 24
GCONV2 = 24
HID_LAYER1 = 40
HID_LAYER2 = 24
HID_LAYER3 = 24
WFINAL = 0.003
EPS = 1e-5

_LANES = 128  # lane width of the packed parameter slabs
_BIAS_ROW = {"b1": 0, "bc12": 1, "bc2": 2, "b2": 3, "bres": 4, "b3": 5}

_dot_hp = functools.partial(jnp.dot, precision=jax.lax.Precision.HIGHEST)


def _pad8(n):
    return (n + 7) // 8 * 8


def _row_offsets(delay_dim, res_dim):
    """Sublane (row) offsets of each folded weight inside the packed weight slab."""
    sizes = [
        ("w1d", delay_dim),    # fc1 rows for the N_DELAY half    -> (delay_dim, 40)
        ("w1r", res_dim),      # fc1 rows for the N (res) half    -> (res_dim, 40)
        ("wc12", HID_LAYER1),  # conv1.W @ conv2.W                -> (40, 24)
        ("w2", GCONV2),        # fc2 (bn1 affine folded in)       -> (24, 24)
        ("wres", res_dim),     # fcres (normres affine folded in) -> (res_dim, 24)
        ("w3t", HID_LAYER2),   # fc3 rows for the ht half         -> (24, action)
        ("w3b", HID_LAYER3),   # fc3 rows for the hres half       -> (24, action)
    ]
    offs, r = {}, 0
    for name, rows in sizes:
        offs[name] = r
        r += _pad8(rows)
    return offs, r


def _bn_stats(x):
    """Training-mode BatchNorm1d, statistics only (affine folded into next linear)."""
    mu = jnp.mean(x, axis=0, keepdims=True)
    var = jnp.mean(jnp.square(x - mu), axis=0, keepdims=True)
    return (x - mu) * jax.lax.rsqrt(var + EPS)


def _make_kernel(delay_dim, res_dim, action_dim):
    offs, _ = _row_offsets(delay_dim, res_dim)
    br = _BIAS_ROW
    f32 = jnp.float32

    def kernel(xd_ref, xr_ref, adj2_ref, deg_ref, w_ref, b_ref, out_ref):
        xd = xd_ref[...]      # (N, delay_dim)   g.ndata['N_DELAY']
        xr = xr_ref[...]      # (N, res_dim)     g.ndata['N']
        adj2 = adj2_ref[...]  # (N, N)           A_hat @ A_hat
        deg = deg_ref[...]    # (N, 1)           rowsum(A_hat)

        # norm0 statistics, split across the original cat([N_DELAY, N], dim=1)
        # (per-channel stats, so the split is exact).  xr_n doubles as the
        # normres(ipres) statistics-normalized value.
        xd_n = _bn_stats(xd)
        xr_n = _bn_stats(xr)

        # h1 = ReLU(fc1(norm0(ip)))  -- norm0 affine folded into w1d/w1r/b1.
        w1d = w_ref[offs["w1d"]:offs["w1d"] + delay_dim, 0:HID_LAYER1]
        w1r = w_ref[offs["w1r"]:offs["w1r"] + res_dim, 0:HID_LAYER1]
        b1 = b_ref[br["b1"]:br["b1"] + 1, 0:HID_LAYER1]
        h1 = jnp.maximum(
            jnp.dot(xd_n, w1d, preferred_element_type=f32)
            + jnp.dot(xr_n, w1r, preferred_element_type=f32) + b1, 0.0)

        # g2 = conv2(conv1(h1)) collapsed: one weight matmul + one aggregation.
        wc12 = w_ref[offs["wc12"]:offs["wc12"] + HID_LAYER1, 0:GCONV2]
        bc12 = b_ref[br["bc12"]:br["bc12"] + 1, 0:GCONV2]
        bc2 = b_ref[br["bc2"]:br["bc2"] + 1, 0:GCONV2]
        g2 = (jnp.dot(adj2, jnp.dot(h1, wc12, preferred_element_type=f32),
                      preferred_element_type=f32)
              + deg * bc12 + bc2)

        # ht = ReLU(fc2(bn1(g2)))  -- bn1 affine folded into w2/b2.
        w2 = w_ref[offs["w2"]:offs["w2"] + GCONV2, 0:HID_LAYER2]
        b2 = b_ref[br["b2"]:br["b2"] + 1, 0:HID_LAYER2]
        ht = jnp.maximum(
            jnp.dot(_bn_stats(g2), w2, preferred_element_type=f32) + b2, 0.0)

        # hres = fcres(normres(ipres))  -- normres affine folded into wres/bres.
        wres = w_ref[offs["wres"]:offs["wres"] + res_dim, 0:HID_LAYER3]
        bres = b_ref[br["bres"]:br["bres"] + 1, 0:HID_LAYER3]
        hres = jnp.dot(xr_n, wres, preferred_element_type=f32) + bres

        # logits = fc3(bn2(cat([ht, hres]))) without the lane concat:
        # per-half BN statistics + split fc3 rows (bn2 affine folded in).
        w3t = w_ref[offs["w3t"]:offs["w3t"] + HID_LAYER2, 0:action_dim]
        w3b = w_ref[offs["w3b"]:offs["w3b"] + HID_LAYER3, 0:action_dim]
        b3 = b_ref[br["b3"]:br["b3"] + 1, 0:action_dim]
        logits = (jnp.dot(_bn_stats(ht), w3t, preferred_element_type=f32)
                  + jnp.dot(_bn_stats(hres), w3b, preferred_element_type=f32) + b3)

        # Softmax(dim=1); reciprocal runs on the otherwise-idle EUP slot.
        m = jnp.max(logits, axis=1, keepdims=True)
        e = jnp.exp(logits - m)
        inv = pl.reciprocal(jnp.sum(e, axis=1, keepdims=True), approx=True)
        out_ref[...] = e * inv

    return kernel


def init_params(key, state_dim, res_dim, action_dim):
    """Raw parameters mimicking the module's __init__ (Linear weights stored (in, out))."""
    ks = jax.random.split(key, 10)

    def fanin_uniform(k, shape, fanin):
        w = 1.0 / jnp.sqrt(jnp.asarray(fanin, jnp.float32))
        return jax.random.uniform(k, shape, jnp.float32, -w, w)

    w1 = fanin_uniform(ks[0], (state_dim, HID_LAYER1), HID_LAYER1)
    bb1 = fanin_uniform(ks[1], (1, HID_LAYER1), state_dim)
    wc1 = fanin_uniform(ks[2], (HID_LAYER1, GCONV1), HID_LAYER1)
    bc1 = jnp.zeros((1, GCONV1), jnp.float32)           # DGL GraphConv bias init = 0
    wc2 = fanin_uniform(ks[3], (GCONV1, GCONV2), GCONV1)
    bc2 = jnp.zeros((1, GCONV2), jnp.float32)
    w2 = fanin_uniform(ks[4], (GCONV2, HID_LAYER2), HID_LAYER2)
    bb2 = fanin_uniform(ks[5], (1, HID_LAYER2), GCONV2)
    wres = jax.random.uniform(ks[6], (res_dim, HID_LAYER3), jnp.float32, -WFINAL, WFINAL)
    bwres = fanin_uniform(ks[7], (1, HID_LAYER3), res_dim)
    w3 = jax.random.uniform(ks[8], (HID_LAYER2 + HID_LAYER3, action_dim),
                            jnp.float32, -WFINAL, WFINAL)
    bb3 = fanin_uniform(ks[9], (1, action_dim), HID_LAYER2 + HID_LAYER3)

    # BatchNorm affine params (PyTorch defaults: gamma = 1, beta = 0).
    g0 = jnp.ones((1, state_dim), jnp.float32)
    b0 = jnp.zeros((1, state_dim), jnp.float32)
    gbn1 = jnp.ones((1, GCONV2), jnp.float32)
    bbn1 = jnp.zeros((1, GCONV2), jnp.float32)
    gres = jnp.ones((1, res_dim), jnp.float32)
    bres = jnp.zeros((1, res_dim), jnp.float32)
    gbn2 = jnp.ones((1, HID_LAYER2 + HID_LAYER3), jnp.float32)
    bbn2 = jnp.zeros((1, HID_LAYER2 + HID_LAYER3), jnp.float32)

    return (g0, b0, w1, bb1, wc1, bc1, wc2, bc2, gbn1, bbn1,
            w2, bb2, gres, bres, wres, bwres, gbn2, bbn2, w3, bb3)


def pack_params(params, delay_dim, res_dim):
    """Fold BN affines, collapse the GraphConv pair, and pack everything into two slabs."""
    (g0, b0, w1, bb1, wc1, bc1, wc2, bc2, gbn1, bbn1,
     w2, bb2, gres, bres, wres, bwres, gbn2, bbn2, w3, bb3) = params

    # norm0 affine folded into fc1, split across the [delay | res] concat.
    g0d, g0r = g0[:, :delay_dim], g0[:, delay_dim:]
    b0d, b0r = b0[:, :delay_dim], b0[:, delay_dim:]
    w1d_raw, w1r_raw = w1[:delay_dim], w1[delay_dim:]
    w1d = g0d.T * w1d_raw
    w1r = g0r.T * w1r_raw
    b1 = _dot_hp(b0d, w1d_raw) + _dot_hp(b0r, w1r_raw) + bb1

    # conv1 . conv2 collapsed (no nonlinearity in between).
    wc12 = _dot_hp(wc1, wc2)
    bc12 = _dot_hp(bc1, wc2)

    # bn1 affine folded into fc2.
    w2f = gbn1.T * w2
    b2 = _dot_hp(bbn1, w2) + bb2

    # normres affine folded into fcres.
    wresf = gres.T * wres
    bresf = _dot_hp(bres, wres) + bwres

    # bn2 affine folded into fc3, split across the [ht | hres] concat.
    w3t = gbn2[:, :HID_LAYER2].T * w3[:HID_LAYER2]
    w3b = gbn2[:, HID_LAYER2:].T * w3[HID_LAYER2:]
    b3 = _dot_hp(bbn2, w3) + bb3

    offs, total_rows = _row_offsets(delay_dim, res_dim)
    wslab = jnp.zeros((total_rows, _LANES), jnp.float32)
    for name, w in (("w1d", w1d), ("w1r", w1r), ("wc12", wc12), ("w2", w2f),
                    ("wres", wresf), ("w3t", w3t), ("w3b", w3b)):
        r, c = w.shape
        wslab = wslab.at[offs[name]:offs[name] + r, 0:c].set(w)

    bslab = jnp.zeros((8, _LANES), jnp.float32)
    for name, b in (("b1", b1), ("bc12", bc12), ("bc2", bc2), ("b2", b2),
                    ("bres", bresf), ("b3", b3)):
        bslab = bslab.at[_BIAS_ROW[name]:_BIAS_ROW[name] + 1, 0:b.shape[1]].set(b)

    return wslab, bslab


@functools.partial(jax.jit, static_argnames=("dims",))
def actor_forward(wslab, bslab, ip_delay, ipres, adj, *, dims):
    """Jitted wrapper: tiny adjacency prep + one pallas_call with 6 inputs (no grid)."""
    delay_dim, res_dim, action_dim = dims
    N = ip_delay.shape[0]
    xd = ip_delay.astype(jnp.float32)
    xr = ipres.astype(jnp.float32)
    adj = adj.astype(jnp.float32)

    # DGL GraphConv norm='both': A_hat = D_in^{-1/2} A^T D_out^{-1/2}, degrees
    # clamped to >= 1 (allow_zero_in_degree=True).  The kernel consumes
    # A_hat @ A_hat (collapsed conv pair) and rowsum(A_hat) (folded conv1 bias).
    out_deg = jnp.maximum(jnp.sum(adj, axis=1), 1.0)
    in_deg = jnp.maximum(jnp.sum(adj, axis=0), 1.0)
    adj_hat = (adj.T * jax.lax.rsqrt(in_deg)[:, None]) * jax.lax.rsqrt(out_deg)[None, :]
    adj2 = _dot_hp(adj_hat, adj_hat)
    deg = jnp.sum(adj_hat, axis=1, keepdims=True)

    kernel = _make_kernel(delay_dim, res_dim, action_dim)
    return pl.pallas_call(
        kernel,
        out_shape=jax.ShapeDtypeStruct((N, action_dim), jnp.float32),
        in_specs=[pl.BlockSpec(memory_space=pltpu.MemorySpace.VMEM)] * 6,
        out_specs=pl.BlockSpec(memory_space=pltpu.MemorySpace.VMEM),
    )(xd, xr, adj2, deg, wslab, bslab)


def actor_reference(params, ip_delay, ipres, adj):
    """Unfused pure-JAX reference mirroring the PyTorch module's forward structure."""
    (g0, b0, w1, bb1, wc1, bc1, wc2, bc2, gbn1, bbn1,
     w2, bb2, gres, bres, wres, bwres, gbn2, bbn2, w3, bb3) = params

    def bn(x, g, b):
        mu = jnp.mean(x, axis=0, keepdims=True)
        var = jnp.mean(jnp.square(x - mu), axis=0, keepdims=True)
        return (x - mu) * jax.lax.rsqrt(var + EPS) * g + b

    ip = jnp.concatenate([ip_delay, ipres], axis=1).astype(jnp.float32)
    adj = adj.astype(jnp.float32)
    out_deg = jnp.maximum(jnp.sum(adj, axis=1), 1.0)
    in_deg = jnp.maximum(jnp.sum(adj, axis=0), 1.0)
    adj_hat = (adj.T * jax.lax.rsqrt(in_deg)[:, None]) * jax.lax.rsqrt(out_deg)[None, :]

    h1 = jax.nn.relu(_dot_hp(bn(ip, g0, b0), w1) + bb1)
    g1 = _dot_hp(adj_hat, _dot_hp(h1, wc1)) + bc1
    g2 = _dot_hp(adj_hat, _dot_hp(g1, wc2)) + bc2
    ht = jax.nn.relu(_dot_hp(bn(g2, gbn1, bbn1), w2) + bb2)
    hres = _dot_hp(bn(ipres.astype(jnp.float32), gres, bres), wres) + bwres
    h2 = jnp.concatenate([ht, hres], axis=1)
    logits = _dot_hp(bn(h2, gbn2, bbn2), w3) + bb3
    return jax.nn.softmax(logits, axis=1)


if __name__ == "__main__":
    N = 8                      # graph nodes (batch dim for BatchNorm1d)
    delay_dim = 8              # g.ndata['N_DELAY'] feature width
    res_dim = 4                # g.ndata['N'] feature width (resDim)
    state_dim = delay_dim + res_dim
    action_dim = 6

    key = jax.random.PRNGKey(0)
    k1, k2, k3, k4 = jax.random.split(key, 4)
    ip_delay = jax.random.normal(k1, (N, delay_dim), jnp.float32)
    ipres = jax.random.normal(k2, (N, res_dim), jnp.float32)
    adj = (jax.random.uniform(k3, (N, N)) < 0.3).astype(jnp.float32)  # adj[src, dst]

    raw_params = init_params(k4, state_dim, res_dim, action_dim)
    wslab, bslab = pack_params(raw_params, delay_dim, res_dim)

    action = actor_forward(wslab, bslab, ip_delay, ipres, adj,
                           dims=(delay_dim, res_dim, action_dim))
    action = jax.block_until_ready(action)

    ref = actor_reference(raw_params, ip_delay, ipres, adj)

    assert action.shape == (N, action_dim)
    assert bool(jnp.all(jnp.isfinite(action)))
    # Tolerances account for the approximate-reciprocal softmax denominator and
    # the float reassociation introduced by the param folds.
    assert bool(jnp.allclose(jnp.sum(action, axis=1), 1.0, atol=5e-3))
    assert bool(jnp.allclose(action, ref, atol=3e-3, rtol=3e-3))
    print("KERNEL_OK")
</pallas_src>

<mosaic_0001>
module attributes {stable_mosaic.version = 11 : i64} {
  func.func @kernel(%arg0: memref<8x8xf32, #tpu.memory_space<vmem>>, %arg1: memref<8x4xf32, #tpu.memory_space<vmem>>, %arg2: memref<8x8xf32, #tpu.memory_space<vmem>>, %arg3: memref<8x1xf32, #tpu.memory_space<vmem>>, %arg4: memref<136x128xf32, #tpu.memory_space<vmem>>, %arg5: memref<8x128xf32, #tpu.memory_space<vmem>>, %arg6: memref<8x6xf32, #tpu.memory_space<vmem>>) attributes {dimension_semantics = [], scalar_prefetch = 0 : i64, scratch_operands = 0 : i64, tpu.core_type = #tpu.core_type<tc>} {
    %c0 = arith.constant 0 : index
    %c0_0 = arith.constant 0 : index
    %0 = vector.load %arg0[%c0, %c0_0] : memref<8x8xf32, #tpu.memory_space<vmem>>, vector<8x8xf32>
    %c0_1 = arith.constant 0 : index
    %c0_2 = arith.constant 0 : index
    %1 = vector.load %arg1[%c0_1, %c0_2] : memref<8x4xf32, #tpu.memory_space<vmem>>, vector<8x4xf32>
    %c0_3 = arith.constant 0 : index
    %c0_4 = arith.constant 0 : index
    %2 = vector.load %arg2[%c0_3, %c0_4] : memref<8x8xf32, #tpu.memory_space<vmem>>, vector<8x8xf32>
    %c0_5 = arith.constant 0 : index
    %c0_6 = arith.constant 0 : index
    %3 = vector.load %arg3[%c0_5, %c0_6] : memref<8x1xf32, #tpu.memory_space<vmem>>, vector<8x1xf32>
    %cst = arith.constant dense<0.000000e+00> : vector<8xf32>
    %4 = vector.multi_reduction <add>, %0, %cst [0] : vector<8x8xf32> to vector<8xf32>
    %5 = vector.shape_cast %4 : vector<8xf32> to vector<1x8xf32>
    %cst_7 = arith.constant 8.000000e+00 : f32
    %6 = vector.broadcast %cst_7 : f32 to vector<1x8xf32>
    %7 = arith.divf %5, %6 : vector<1x8xf32>
    %8 = vector.broadcast %7 : vector<1x8xf32> to vector<8x8xf32>
    %9 = arith.subf %0, %8 : vector<8x8xf32>
    %10 = arith.mulf %9, %9 : vector<8x8xf32>
    %cst_8 = arith.constant dense<0.000000e+00> : vector<8xf32>
    %11 = vector.multi_reduction <add>, %10, %cst_8 [0] : vector<8x8xf32> to vector<8xf32>
    %12 = vector.shape_cast %11 : vector<8xf32> to vector<1x8xf32>
    %cst_9 = arith.constant 8.000000e+00 : f32
    %13 = vector.broadcast %cst_9 : f32 to vector<1x8xf32>
    %14 = arith.divf %12, %13 : vector<1x8xf32>
    %15 = vector.broadcast %7 : vector<1x8xf32> to vector<8x8xf32>
    %16 = arith.subf %0, %15 : vector<8x8xf32>
    %cst_10 = arith.constant 9.99999974E-6 : f32
    %17 = vector.broadcast %cst_10 : f32 to vector<1x8xf32>
    %18 = arith.addf %14, %17 : vector<1x8xf32>
    %19 = math.rsqrt %18 : vector<1x8xf32>
    %20 = vector.broadcast %19 : vector<1x8xf32> to vector<8x8xf32>
    %21 = arith.mulf %16, %20 : vector<8x8xf32>
    %cst_11 = arith.constant dense<0.000000e+00> : vector<4xf32>
    %22 = vector.multi_reduction <add>, %1, %cst_11 [0] : vector<8x4xf32> to vector<4xf32>
    %23 = vector.shape_cast %22 : vector<4xf32> to vector<1x4xf32>
    %cst_12 = arith.constant 8.000000e+00 : f32
    %24 = vector.broadcast %cst_12 : f32 to vector<1x4xf32>
    %25 = arith.divf %23, %24 : vector<1x4xf32>
    %26 = vector.broadcast %25 : vector<1x4xf32> to vector<8x4xf32>
    %27 = arith.subf %1, %26 : vector<8x4xf32>
    %28 = arith.mulf %27, %27 : vector<8x4xf32>
    %cst_13 = arith.constant dense<0.000000e+00> : vector<4xf32>
    %29 = vector.multi_reduction <add>, %28, %cst_13 [0] : vector<8x4xf32> to vector<4xf32>
    %30 = vector.shape_cast %29 : vector<4xf32> to vector<1x4xf32>
    %cst_14 = arith.constant 8.000000e+00 : f32
    %31 = vector.broadcast %cst_14 : f32 to vector<1x4xf32>
    %32 = arith.divf %30, %31 : vector<1x4xf32>
    %33 = vector.broadcast %25 : vector<1x4xf32> to vector<8x4xf32>
    %34 = arith.subf %1, %33 : vector<8x4xf32>
    %cst_15 = arith.constant 9.99999974E-6 : f32
    %35 = vector.broadcast %cst_15 : f32 to vector<1x4xf32>
    %36 = arith.addf %32, %35 : vector<1x4xf32>
    %37 = math.rsqrt %36 : vector<1x4xf32>
    %38 = vector.broadcast %37 : vector<1x4xf32> to vector<8x4xf32>
    %39 = arith.mulf %34, %38 : vector<8x4xf32>
    %c0_16 = arith.constant 0 : index
    %c0_17 = arith.constant 0 : index
    %40 = vector.load %arg4[%c0_16, %c0_17] : memref<136x128xf32, #tpu.memory_space<vmem>>, vector<8x40xf32>
    %c8 = arith.constant 8 : index
    %c0_18 = arith.constant 0 : index
    %41 = vector.load %arg4[%c8, %c0_18] : memref<136x128xf32, #tpu.memory_space<vmem>>, vector<4x40xf32>
    %c0_19 = arith.constant 0 : index
    %c0_20 = arith.constant 0 : index
    %42 = vector.load %arg5[%c0_19, %c0_20] : memref<8x128xf32, #tpu.memory_space<vmem>>, vector<1x40xf32>
    %cst_21 = arith.constant dense<0.000000e+00> : vector<8x40xf32>
    %43 = tpu.matmul %21, %40, %cst_21 {dimension_numbers = #tpu.dot_dimension_numbers<[1], [0], [0], [1], [0, 0, 1, 1], [], []>} : vector<8x8xf32>, vector<8x40xf32>, vector<8x40xf32> -> vector<8x40xf32>
    %cst_22 = arith.constant dense<0.000000e+00> : vector<8x40xf32>
    %44 = tpu.matmul %39, %41, %cst_22 {dimension_numbers = #tpu.dot_dimension_numbers<[1], [0], [0], [1], [0, 0, 1, 1], [], []>} : vector<8x4xf32>, vector<4x40xf32>, vector<8x40xf32> -> vector<8x40xf32>
    %45 = arith.addf %43, %44 : vector<8x40xf32>
    %46 = vector.broadcast %42 : vector<1x40xf32> to vector<8x40xf32>
    %47 = arith.addf %45, %46 : vector<8x40xf32>
    %cst_23 = arith.constant 0.000000e+00 : f32
    %48 = vector.broadcast %cst_23 : f32 to vector<8x40xf32>
    %49 = arith.maximumf %47, %48 : vector<8x40xf32>
    %c16 = arith.constant 16 : index
    %c0_24 = arith.constant 0 : index
    %50 = vector.load %arg4[%c16, %c0_24] : memref<136x128xf32, #tpu.memory_space<vmem>>, vector<40x24xf32>
    %c1 = arith.constant 1 : index
    %c0_25 = arith.constant 0 : index
    %51 = vector.load %arg5[%c1, %c0_25] : memref<8x128xf32, #tpu.memory_space<vmem>>, vector<1x24xf32>
    %c2 = arith.constant 2 : index
    %c0_26 = arith.constant 0 : index
    %52 = vector.load %arg5[%c2, %c0_26] : memref<8x128xf32, #tpu.memory_space<vmem>>, vector<1x24xf32>
    %cst_27 = arith.constant dense<0.000000e+00> : vector<8x24xf32>
    %53 = tpu.matmul %49, %50, %cst_27 {dimension_numbers = #tpu.dot_dimension_numbers<[1], [0], [0], [1], [0, 0, 1, 1], [], []>} : vector<8x40xf32>, vector<40x24xf32>, vector<8x24xf32> -> vector<8x24xf32>
    %cst_28 = arith.constant dense<0.000000e+00> : vector<8x24xf32>
    %54 = tpu.matmul %2, %53, %cst_28 {dimension_numbers = #tpu.dot_dimension_numbers<[1], [0], [0], [1], [0, 0, 1, 1], [], []>} : vector<8x8xf32>, vector<8x24xf32>, vector<8x24xf32> -> vector<8x24xf32>
    %55 = vector.broadcast %3 : vector<8x1xf32> to vector<8x24xf32>
    %56 = vector.broadcast %51 : vector<1x24xf32> to vector<8x24xf32>
    %57 = arith.mulf %55, %56 : vector<8x24xf32>
    %58 = arith.addf %54, %57 : vector<8x24xf32>
    %59 = vector.broadcast %52 : vector<1x24xf32> to vector<8x24xf32>
    %60 = arith.addf %58, %59 : vector<8x24xf32>
    %c56 = arith.constant 56 : index
    %c0_29 = arith.constant 0 : index
    %61 = vector.load %arg4[%c56, %c0_29] : memref<136x128xf32, #tpu.memory_space<vmem>>, vector<24x24xf32>
    %c3 = arith.constant 3 : index
    %c0_30 = arith.constant 0 : index
    %62 = vector.load %arg5[%c3, %c0_30] : memref<8x128xf32, #tpu.memory_space<vmem>>, vector<1x24xf32>
    %cst_31 = arith.constant dense<0.000000e+00> : vector<24xf32>
    %63 = vector.multi_reduction <add>, %60, %cst_31 [0] : vector<8x24xf32> to vector<24xf32>
    %64 = vector.shape_cast %63 : vector<24xf32> to vector<1x24xf32>
    %cst_32 = arith.constant 8.000000e+00 : f32
    %65 = vector.broadcast %cst_32 : f32 to vector<1x24xf32>
    %66 = arith.divf %64, %65 : vector<1x24xf32>
    %67 = vector.broadcast %66 : vector<1x24xf32> to vector<8x24xf32>
    %68 = arith.subf %60, %67 : vector<8x24xf32>
    %69 = arith.mulf %68, %68 : vector<8x24xf32>
    %cst_33 = arith.constant dense<0.000000e+00> : vector<24xf32>
    %70 = vector.multi_reduction <add>, %69, %cst_33 [0] : vector<8x24xf32> to vector<24xf32>
    %71 = vector.shape_cast %70 : vector<24xf32> to vector<1x24xf32>
    %cst_34 = arith.constant 8.000000e+00 : f32
    %72 = vector.broadcast %cst_34 : f32 to vector<1x24xf32>
    %73 = arith.divf %71, %72 : vector<1x24xf32>
    %74 = vector.broadcast %66 : vector<1x24xf32> to vector<8x24xf32>
    %75 = arith.subf %60, %74 : vector<8x24xf32>
    %cst_35 = arith.constant 9.99999974E-6 : f32
    %76 = vector.broadcast %cst_35 : f32 to vector<1x24xf32>
    %77 = arith.addf %73, %76 : vector<1x24xf32>
    %78 = math.rsqrt %77 : vector<1x24xf32>
    %79 = vector.broadcast %78 : vector<1x24xf32> to vector<8x24xf32>
    %80 = arith.mulf %75, %79 : vector<8x24xf32>
    %cst_36 = arith.constant dense<0.000000e+00> : vector<8x24xf32>
    %81 = tpu.matmul %80, %61, %cst_36 {dimension_numbers = #tpu.dot_dimension_numbers<[1], [0], [0], [1], [0, 0, 1, 1], [], []>} : vector<8x24xf32>, vector<24x24xf32>, vector<8x24xf32> -> vector<8x24xf32>
    %82 = vector.broadcast %62 : vector<1x24xf32> to vector<8x24xf32>
    %83 = arith.addf %81, %82 : vector<8x24xf32>
    %cst_37 = arith.constant 0.000000e+00 : f32
    %84 = vector.broadcast %cst_37 : f32 to vector<8x24xf32>
    %85 = arith.maximumf %83, %84 : vector<8x24xf32>
    %c80 = arith.constant 80 : index
    %c0_38 = arith.constant 0 : index
    %86 = vector.load %arg4[%c80, %c0_38] : memref<136x128xf32, #tpu.memory_space<vmem>>, vector<4x24xf32>
    %c4 = arith.constant 4 : index
    %c0_39 = arith.constant 0 : index
    %87 = vector.load %arg5[%c4, %c0_39] : memref<8x128xf32, #tpu.memory_space<vmem>>, vector<1x24xf32>
    %cst_40 = arith.constant dense<0.000000e+00> : vector<8x24xf32>
    %88 = tpu.matmul %39, %86, %cst_40 {dimension_numbers = #tpu.dot_dimension_numbers<[1], [0], [0], [1], [0, 0, 1, 1], [], []>} : vector<8x4xf32>, vector<4x24xf32>, vector<8x24xf32> -> vector<8x24xf32>
    %89 = vector.broadcast %87 : vector<1x24xf32> to vector<8x24xf32>
    %90 = arith.addf %88, %89 : vector<8x24xf32>
    %c88 = arith.constant 88 : index
    %c0_41 = arith.constant 0 : index
    %91 = vector.load %arg4[%c88, %c0_41] : memref<136x128xf32, #tpu.memory_space<vmem>>, vector<24x6xf32>
    %c112 = arith.constant 112 : index
    %c0_42 = arith.constant 0 : index
    %92 = vector.load %arg4[%c112, %c0_42] : memref<136x128xf32, #tpu.memory_space<vmem>>, vector<24x6xf32>
    %c5 = arith.constant 5 : index
    %c0_43 = arith.constant 0 : index
    %93 = vector.load %arg5[%c5, %c0_43] : memref<8x128xf32, #tpu.memory_space<vmem>>, vector<1x6xf32>
    %cst_44 = arith.constant dense<0.000000e+00> : vector<24xf32>
    %94 = vector.multi_reduction <add>, %85, %cst_44 [0] : vector<8x24xf32> to vector<24xf32>
    %95 = vector.shape_cast %94 : vector<24xf32> to vector<1x24xf32>
    %cst_45 = arith.constant 8.000000e+00 : f32
    %96 = vector.broadcast %cst_45 : f32 to vector<1x24xf32>
    %97 = arith.divf %95, %96 : vector<1x24xf32>
    %98 = vector.broadcast %97 : vector<1x24xf32> to vector<8x24xf32>
    %99 = arith.subf %85, %98 : vector<8x24xf32>
    %100 = arith.mulf %99, %99 : vector<8x24xf32>
    %cst_46 = arith.constant dense<0.000000e+00> : vector<24xf32>
    %101 = vector.multi_reduction <add>, %100, %cst_46 [0] : vector<8x24xf32> to vector<24xf32>
    %102 = vector.shape_cast %101 : vector<24xf32> to vector<1x24xf32>
    %cst_47 = arith.constant 8.000000e+00 : f32
    %103 = vector.broadcast %cst_47 : f32 to vector<1x24xf32>
    %104 = arith.divf %102, %103 : vector<1x24xf32>
    %105 = vector.broadcast %97 : vector<1x24xf32> to vector<8x24xf32>
    %106 = arith.subf %85, %105 : vector<8x24xf32>
    %cst_48 = arith.constant 9.99999974E-6 : f32
    %107 = vector.broadcast %cst_48 : f32 to vector<1x24xf32>
    %108 = arith.addf %104, %107 : vector<1x24xf32>
    %109 = math.rsqrt %108 : vector<1x24xf32>
    %110 = vector.broadcast %109 : vector<1x24xf32> to vector<8x24xf32>
    %111 = arith.mulf %106, %110 : vector<8x24xf32>
    %cst_49 = arith.constant dense<0.000000e+00> : vector<8x6xf32>
    %112 = tpu.matmul %111, %91, %cst_49 {dimension_numbers = #tpu.dot_dimension_numbers<[1], [0], [0], [1], [0, 0, 1, 1], [], []>} : vector<8x24xf32>, vector<24x6xf32>, vector<8x6xf32> -> vector<8x6xf32>
    %cst_50 = arith.constant dense<0.000000e+00> : vector<24xf32>
    %113 = vector.multi_reduction <add>, %90, %cst_50 [0] : vector<8x24xf32> to vector<24xf32>
    %114 = vector.shape_cast %113 : vector<24xf32> to vector<1x24xf32>
    %cst_51 = arith.constant 8.000000e+00 : f32
    %115 = vector.broadcast %cst_51 : f32 to vector<1x24xf32>
    %116 = arith.divf %114, %115 : vector<1x24xf32>
    %117 = vector.broadcast %116 : vector<1x24xf32> to vector<8x24xf32>
    %118 = arith.subf %90, %117 : vector<8x24xf32>
    %119 = arith.mulf %118, %118 : vector<8x24xf32>
    %cst_52 = arith.constant dense<0.000000e+00> : vector<24xf32>
    %120 = vector.multi_reduction <add>, %119, %cst_52 [0] : vector<8x24xf32> to vector<24xf32>
    %121 = vector.shape_cast %120 : vector<24xf32> to vector<1x24xf32>
    %cst_53 = arith.constant 8.000000e+00 : f32
    %122 = vector.broadcast %cst_53 : f32 to vector<1x24xf32>
    %123 = arith.divf %121, %122 : vector<1x24xf32>
    %124 = vector.broadcast %116 : vector<1x24xf32> to vector<8x24xf32>
    %125 = arith.subf %90, %124 : vector<8x24xf32>
    %cst_54 = arith.constant 9.99999974E-6 : f32
    %126 = vector.broadcast %cst_54 : f32 to vector<1x24xf32>
    %127 = arith.addf %123, %126 : vector<1x24xf32>
    %128 = math.rsqrt %127 : vector<1x24xf32>
    %129 = vector.broadcast %128 : vector<1x24xf32> to vector<8x24xf32>
    %130 = arith.mulf %125, %129 : vector<8x24xf32>
    %cst_55 = arith.constant dense<0.000000e+00> : vector<8x6xf32>
    %131 = tpu.matmul %130, %92, %cst_55 {dimension_numbers = #tpu.dot_dimension_numbers<[1], [0], [0], [1], [0, 0, 1, 1], [], []>} : vector<8x24xf32>, vector<24x6xf32>, vector<8x6xf32> -> vector<8x6xf32>
    %132 = arith.addf %112, %131 : vector<8x6xf32>
    %133 = vector.broadcast %93 : vector<1x6xf32> to vector<8x6xf32>
    %134 = arith.addf %132, %133 : vector<8x6xf32>
    %cst_56 = arith.constant dense<0xFF800000> : vector<8xf32>
    %135 = vector.multi_reduction <maximumf>, %134, %cst_56 [1] : vector<8x6xf32> to vector<8xf32>
    %136 = vector.shape_cast %135 : vector<8xf32> to vector<8x1xf32>
    %137 = vector.broadcast %136 : vector<8x1xf32> to vector<8x6xf32>
    %138 = arith.subf %134, %137 : vector<8x6xf32>
    %139 = math.exp %138 : vector<8x6xf32>
    %cst_57 = arith.constant dense<0.000000e+00> : vector<8xf32>
    %140 = vector.multi_reduction <add>, %139, %cst_57 [1] : vector<8x6xf32> to vector<8xf32>
    %141 = vector.shape_cast %140 : vector<8xf32> to vector<8x1xf32>
    %142 = tpu.reciprocal %141 {approx = true} : vector<8x1xf32> -> vector<8x1xf32>
    %143 = vector.broadcast %142 : vector<8x1xf32> to vector<8x6xf32>
    %144 = arith.mulf %139, %143 : vector<8x6xf32>
    %c0_58 = arith.constant 0 : index
    %c0_59 = arith.constant 0 : index
    %145 = vector.load %arg6[%c0_58, %c0_59] : memref<8x6xf32, #tpu.memory_space<vmem>>, vector<8x6xf32>
    tpu.vector_store %arg6[%c0_58, %c0_59], %144 {strides = array<i32>} : memref<8x6xf32, #tpu.memory_space<vmem>>, vector<8x6xf32>,
    return
  }
}

</mosaic_0001>

<llo_original>
// kernel: actor_forward.1
$region0: #{actor_forward.1}
  #allocation0 [shape = 'u32[]', space=smem, size = 0x4, offset = 0x4, fixed_abs, tag = 'smem constant byte address 0x4 - core index']
  #allocation1 [shape = 'u32[72,128]{1,0:T(1,128)}', space=vmem, size = 0x9000, scoped, tag = 'internal scratch']
  %s0 = inlined_call_operand.vmem [shape: f32[8,8], index: 0, kind: input, shape index: {}]
  %s1 = inlined_call_operand.vmem [shape: f32[8,4], index: 1, kind: input, shape index: {}]
  %s2 = inlined_call_operand.vmem [shape: f32[8,8], index: 2, kind: input, shape index: {}]
  %s3 = inlined_call_operand.vmem [shape: f32[8,1], index: 3, kind: input, shape index: {}]
  %s4 = inlined_call_operand.hbm [shape: f32[136,128], index: 4, kind: input, shape index: {}]
  %s5 = inlined_call_operand.vmem [shape: f32[8,128], index: 5, kind: input, shape index: {}]
  %s6 = inlined_call_operand.hbm [shape: f32[8,6], index: 6, kind: output, shape index: {}]
  %s7 = sld [smem:[#allocation0]]
  $region38: #{actor_forward.1} parent=0
    _
  %s9 = ssub.s32 1, %s7
  %s10 = scalar_select 0, %s9, %s7
  $region1: #{actor_forward.1} parent=0
    #allocation2 [shape = 'u8[69632]{0}', space=vmem, size = 0x11000, scoped, tag = 'input window, operand 4, single buffered']
    #allocation3 [shape = 's32[1]{0}', space=sflag, size = 0x4, scoped, tag = 'scoped memory for actor_forward.1']
    #allocation4 [shape = 's32[1]{0}', space=sflag, size = 0x4, scoped, tag = 'scoped memory for actor_forward.1']
    #allocation5 [shape = 'u8[4096]{0}', space=vmem, size = 0x1000, scoped, tag = 'output window, operand 0, single buffered']
    %11 = vsyncpa [#allocation3], 0
    %12 = vsyncpa [#allocation4], 0
    // Predicated region
    $region2: #{actor_forward.1} parent=1 // pred_check
      _
    $region3: #{actor_forward.1} parent=1 // pred_check_branch
      %14 = sbr.rel (0) target = $region5
    $region4: #{actor_forward.1} parent=1 // pred_region
      _
    $region5: #{actor_forward.1} parent=1 // pred_fallthru
      _
    // Predicated region
    $region6: #{actor_forward.1} parent=1 // pred_check
      _
    $region7: #{actor_forward.1} parent=1 // pred_check_branch
      %16 = sbr.rel (0) target = $region9
    $region8: #{actor_forward.1} parent=1 // pred_region
      _
    $region9: #{actor_forward.1} parent=1 // pred_fallthru
      _
    // Predicated region
    $region10: #{actor_forward.1} parent=1 // pred_check
      _
    $region11: #{actor_forward.1} parent=1 // pred_check_branch
      %18 = sbr.rel (0) target = $region13
    $region12: #{actor_forward.1} parent=1 // pred_region
      _
    $region13: #{actor_forward.1} parent=1 // pred_fallthru
      _
    // Predicated region
    $region14: #{actor_forward.1} parent=1 // pred_check
      _
    $region15: #{actor_forward.1} parent=1 // pred_check_branch
      %20 = sbr.rel (0) target = $region17
    $region16: #{actor_forward.1} parent=1 // pred_region
      _
    $region17: #{actor_forward.1} parent=1 // pred_fallthru
      _
    // Predicated region
    $region18: #{actor_forward.1} parent=1 // pred_check
      _
    $region19: #{actor_forward.1} parent=1 // pred_check_branch
      %22 = sbr.rel (0) target = $region21
    $region20: #{actor_forward.1} parent=1 // pred_region
      %24 = vsyncadd [#allocation3], 0
      %s25 = sshll.u32 %s4, 4
      %s26 = int_to_ptr.hbm [resolvable:$true] %s25
      %s27 = sshll.u32 [#allocation2], 4
      %s28 = int_to_ptr.vmem [resolvable:$true] %s27
      %33 = dma.hbm_to_vmem [thread:$0]  %s26, 2176, %s28, [#allocation3], 128, 128, 8
    $region21: #{actor_forward.1} parent=1 // pred_fallthru
      _
    // Predicated region
    $region22: #{actor_forward.1} parent=1 // pred_check
      _
    $region23: #{actor_forward.1} parent=1 // pred_check_branch
      %35 = sbr.rel (0) target = $region25
    $region24: #{actor_forward.1} parent=1 // pred_region
      _
    $region25: #{actor_forward.1} parent=1 // pred_fallthru
      _
    // Predicated region
    $region26: #{actor_forward.1} parent=1 // pred_check
      _
    $region27: #{actor_forward.1} parent=1 // pred_check_branch
      %37 = sbr.rel (0) target = $region29
    $region28: #{actor_forward.1} parent=1 // pred_region
      %39 = dma.done [#allocation3], 2176
    $region29: #{actor_forward.1} parent=1 // pred_fallthru
      _
    %v40 = vld [vmem:[%s0] sm:$0xff]
    %v41 = vld [vmem:[%s1] sm:$0xff]
    %v42 = vld [vmem:[%s2] sm:$0xff]
    %v43 = vld [vmem:[%s3] sm:$0xff]
    %vm44 = vcmask 64512
    %v45 = vsel %vm44, %v40, 0.0
    %v46 = vrot.slane %v45, 4
    %v47 = vadd.f32 %v45, %v46
    %v48 = vrot.slane %v47, 2
    %v49 = vadd.f32 %v47, %v48
    %v50 = vrot.slane %v49, 1
    %v51 = vadd.f32 %v49, %v50
    %v52 = vrcp.pop 8.0
    %v53 = vmul.f32 8.0, %v52
    %v54 = vsub.f32 1.0, %v53
    %v55 = vmul.f32 %v52, %v54
    %v56 = vadd.f32 %v52, %v55
    %vm57 = vweird.f32 %v52
    %v58 = vsel %vm57, %v52, %v56
    %v59 = vmul.f32 %v51, %v58
    %v60 = vsub.f32 %v40, %v59
    %v61 = vmul.f32 %v60, %v60
    %v62 = vsel %vm44, %v61, 0.0
    %v63 = vrot.slane %v62, 4
    %v64 = vadd.f32 %v62, %v63
    %v65 = vrot.slane %v64, 2
    %v66 = vadd.f32 %v64, %v65
    %v67 = vrot.slane %v66, 1
    %v68 = vadd.f32 %v66, %v67
    %v69 = vmul.f32 %v68, %v58
    %v70 = vadd.f32 %v69, 1e-05
    %v71 = vrsqrt.pop %v70
    %v72 = vmul.f32 %v71, %v70
    %v73 = vmul.f32 %v72, %v71
    %v74 = vmul.f32 0.5, %v73
    %v75 = vsub.f32 1.5, %v74
    %v76 = vmul.f32 %v71, %v75
    %vm77 = vweird.f32 %v70
    %vm78 = vweird.f32 %v71
    %vm79 = vmor %vm77, %vm78
    %v80 = vsel %vm79, %v71, %v76
    %v81 = vmul.f32 %v60, %v80
    %vm82 = vcmask 31744
    %v83 = vsel %vm82, %v41, 0.0
    %v84 = vrot.slane %v83, 4
    %v85 = vadd.f32 %v83, %v84
    %v86 = vrot.slane %v85, 2
    %v87 = vadd.f32 %v85, %v86
    %v88 = vrot.slane %v87, 1
    %v89 = vadd.f32 %v87, %v88
    %v90 = vmul.f32 %v89, %v58
    %v91 = vsub.f32 %v41, %v90
    %v92 = vmul.f32 %v91, %v91
    %v93 = vsel %vm82, %v92, 0.0
    %v94 = vrot.slane %v93, 4
    %v95 = vadd.f32 %v93, %v94
    %v96 = vrot.slane %v95, 2
    %v97 = vadd.f32 %v95, %v96
    %v98 = vrot.slane %v97, 1
    %v99 = vadd.f32 %v97, %v98
    %v100 = vmul.f32 %v99, %v58
    %v101 = vadd.f32 %v100, 1e-05
    %v102 = vrsqrt.pop %v101
    %v103 = vmul.f32 %v102, %v101
    %v104 = vmul.f32 %v103, %v102
    %v105 = vmul.f32 0.5, %v104
    %v106 = vsub.f32 1.5, %v105
    %v107 = vmul.f32 %v102, %v106
    %vm108 = vweird.f32 %v101
    %vm109 = vweird.f32 %v102
    %vm110 = vmor %vm108, %vm109
    %v111 = vsel %vm110, %v102, %v107
    %v112 = vmul.f32 %v91, %v111
    %v113 = vld [vmem:[#allocation2] sm:$0xff]
    %v114 = vld [vmem:[#allocation2 + $0x8] sm:$0xf]
    %v115 = vld [vmem:[%s5] sm:$0x1]
    %v117 = vsel %vm82, %v112, 0
    %vm119 = vcmask 1043456
    %v121 = vsel %vm119, %v114, 0
    %123 = vmatpush.msra.mxu0 0.0
    %124 = vmatpush.msra.mxu0 0.0
    %125 = vmatpush.msra.mxu0 0.0
    %126 = vmatpush.msra.mxu0 0.0
    %127 = vmatpush.msra.mxu0 0.0
    %128 = vmatpush.msra.mxu0 0.0
    %129 = vmatpush.msra.mxu0 0.0
    %130 = vmatpush.msra.mxu0 0.0
    %131 = vmatpush.msra.mxu0 0.0
    %132 = vmatpush.msra.mxu0 0.0
    %133 = vmatpush.msra.mxu0 0.0
    %134 = vmatpush.msra.mxu0 0.0
    %135 = vmatpush.msra.mxu0 0.0
    %136 = vmatpush.msra.mxu0 0.0
    %137 = vmatpush.msra.mxu0 0.0
    %138 = vmatpush.msra.mxu0 %v121
    %139 = vmatmul.f32.gmra.mxu0 %v117
    %v140 = vpop.f32.mrf.mxu0
    %v141 = vadd.f32 0.0, %v140
    %142 = vdwg.mxu0
    %v144 = vsel %vm44, %v81, 0
    %146 = vmatpush.msra.mxu0 0.0
    %147 = vmatpush.msra.mxu0 0.0
    %148 = vmatpush.msra.mxu0 0.0
    %149 = vmatpush.msra.mxu0 0.0
    %150 = vmatpush.msra.mxu0 0.0
    %151 = vmatpush.msra.mxu0 0.0
    %152 = vmatpush.msra.mxu0 0.0
    %153 = vmatpush.msra.mxu0 0.0
    %154 = vmatpush.msra.mxu0 0.0
    %155 = vmatpush.msra.mxu0 0.0
    %156 = vmatpush.msra.mxu0 0.0
    %157 = vmatpush.msra.mxu0 0.0
    %158 = vmatpush.msra.mxu0 0.0
    %159 = vmatpush.msra.mxu0 0.0
    %160 = vmatpush.msra.mxu0 0.0
    %161 = vmatpush.msra.mxu0 %v113
    %162 = vmatmul.f32.gmra.mxu0 %v144
    %v163 = vpop.f32.mrf.mxu0
    %v164 = vadd.f32 %v141, %v163
    %165 = vdwg.mxu0
    %v166 = vperm.slane %v115, 0
    %v167 = vadd.f32 %v164, %v166
    %v168 = vmax.f32 %v167, 0.0
    %v169 = vld [vmem:[#allocation2 + $0x10] sm:$0xff]
    %v170 = vld [vmem:[#allocation2 + $0x18] sm:$0xff]
    %v171 = vld [vmem:[#allocation2 + $0x20] sm:$0xff]
    %v172 = vld [vmem:[#allocation2 + $0x28] sm:$0xff]
    %v173 = vld [vmem:[#allocation2 + $0x30] sm:$0xff]
    %v174 = vld [vmem:[%s5 + $0x1] sm:$0x1]
    %v175 = vld [vmem:[%s5 + $0x2] sm:$0x1]
    %vm176 = vcmask 326656
    %v178 = vsel %vm176, %v168, 0
    %180 = vmatpush.msra.mxu0 0.0
    %181 = vmatpush.msra.mxu0 0.0
    %182 = vmatpush.msra.mxu0 0.0
    %183 = vmatpush.msra.mxu0 0.0
    %184 = vmatpush.msra.mxu0 0.0
    %185 = vmatpush.msra.mxu0 0.0
    %186 = vmatpush.msra.mxu0 0.0
    %187 = vmatpush.msra.mxu0 0.0
    %188 = vmatpush.msra.mxu0 0.0
    %189 = vmatpush.msra.mxu0 0.0
    %190 = vmatpush.msra.mxu0 0.0
    %191 = vmatpush.msra.mxu0 %v173
    %192 = vmatpush.msra.mxu0 %v172
    %193 = vmatpush.msra.mxu0 %v171
    %194 = vmatpush.msra.mxu0 %v170
    %195 = vmatpush.msra.mxu0 %v169
    %196 = vmatmul.f32.gmra.mxu0 %v178
    %v197 = vpop.f32.mrf.mxu0
    %v198 = vadd.f32 0.0, %v197
    %199 = vdwg.mxu0
    %201 = vset.pattern.permute.xlu0 0
    %202 = vperm.xlu0 %201, %v43
    %v203 = vpop.permute.xlu0 %202
    %v205 = vperm.slane %v174, 0
    %v206 = vmul.f32 %v203, %v205
    %v208 = vsel %vm44, %v42, 0
    %210 = vmatpush.msra.mxu0 0.0
    %211 = vmatpush.msra.mxu0 0.0
    %212 = vmatpush.msra.mxu0 0.0
    %213 = vmatpush.msra.mxu0 0.0
    %214 = vmatpush.msra.mxu0 0.0
    %215 = vmatpush.msra.mxu0 0.0
    %216 = vmatpush.msra.mxu0 0.0
    %217 = vmatpush.msra.mxu0 0.0
    %218 = vmatpush.msra.mxu0 0.0
    %219 = vmatpush.msra.mxu0 0.0
    %220 = vmatpush.msra.mxu0 0.0
    %221 = vmatpush.msra.mxu0 0.0
    %222 = vmatpush.msra.mxu0 0.0
    %223 = vmatpush.msra.mxu0 0.0
    %224 = vmatpush.msra.mxu0 0.0
    %225 = vmatpush.msra.mxu0 %v198
    %226 = vmatmul.f32.gmra.mxu0 %v208
    %v227 = vpop.f32.mrf.mxu0
    %v228 = vadd.f32 %v206, %v227
    %229 = vdwg.mxu0
    %v230 = vperm.slane %v175, 0
    %v231 = vadd.f32 %v228, %v230
    %v232 = vld [vmem:[#allocation2 + $0x38] sm:$0xff]
    %v233 = vld [vmem:[#allocation2 + $0x40] sm:$0xff]
    %v234 = vld [vmem:[#allocation2 + $0x48] sm:$0xff]
    %v235 = vld [vmem:[%s5 + $0x3] sm:$0x1]
    %vm236 = vcmask 195584
    %v237 = vsel %vm236, %v231, 0.0
    %v238 = vrot.slane %v237, 4
    %v239 = vadd.f32 %v237, %v238
    %v240 = vrot.slane %v239, 2
    %v241 = vadd.f32 %v239, %v240
    %v242 = vrot.slane %v241, 1
    %v243 = vadd.f32 %v241, %v242
    %v244 = vmul.f32 %v243, %v58
    %v245 = vsub.f32 %v231, %v244
    %v246 = vmul.f32 %v245, %v245
    %v247 = vsel %vm236, %v246, 0.0
    %v248 = vrot.slane %v247, 4
    %v249 = vadd.f32 %v247, %v248
    %v250 = vrot.slane %v249, 2
    %v251 = vadd.f32 %v249, %v250
    %v252 = vrot.slane %v251, 1
    %v253 = vadd.f32 %v251, %v252
    %v254 = vmul.f32 %v253, %v58
    %v255 = vadd.f32 %v254, 1e-05
    %v256 = vrsqrt.pop %v255
    %v257 = vmul.f32 %v256, %v255
    %v258 = vmul.f32 %v257, %v256
    %v259 = vmul.f32 0.5, %v258
    %v260 = vsub.f32 1.5, %v259
    %v261 = vmul.f32 %v256, %v260
    %vm262 = vweird.f32 %v255
    %vm263 = vweird.f32 %v256
    %vm264 = vmor %vm262, %vm263
    %v265 = vsel %vm264, %v256, %v261
    %v266 = vmul.f32 %v245, %v265
    %v267 = vperm.slane %v235, 0
    %v269 = vsel %vm236, %v266, 0
    %271 = vmatpush.msra.mxu0 0.0
    %272 = vmatpush.msra.mxu0 0.0
    %273 = vmatpush.msra.mxu0 0.0
    %274 = vmatpush.msra.mxu0 0.0
    %275 = vmatpush.msra.mxu0 0.0
    %276 = vmatpush.msra.mxu0 0.0
    %277 = vmatpush.msra.mxu0 0.0
    %278 = vmatpush.msra.mxu0 0.0
    %279 = vmatpush.msra.mxu0 0.0
    %280 = vmatpush.msra.mxu0 0.0
    %281 = vmatpush.msra.mxu0 0.0
    %282 = vmatpush.msra.mxu0 0.0
    %283 = vmatpush.msra.mxu0 0.0
    %284 = vmatpush.msra.mxu0 %v234
    %285 = vmatpush.msra.mxu0 %v233
    %286 = vmatpush.msra.mxu0 %v232
    %287 = vmatmul.f32.gmra.mxu0 %v269
    %v288 = vpop.f32.mrf.mxu0
    %v289 = vadd.f32 %v267, %v288
    %290 = vdwg.mxu0
    %v291 = vmax.f32 %v289, 0.0
    %v292 = vld [vmem:[#allocation2 + $0x50] sm:$0xf]
    %v293 = vld [vmem:[%s5 + $0x4] sm:$0x1]
    %v294 = vperm.slane %v293, 0
    %v296 = vsel %vm119, %v292, 0
    %298 = vmatpush.msra.mxu0 0.0
    %299 = vmatpush.msra.mxu0 0.0
    %300 = vmatpush.msra.mxu0 0.0
    %301 = vmatpush.msra.mxu0 0.0
    %302 = vmatpush.msra.mxu0 0.0
    %303 = vmatpush.msra.mxu0 0.0
    %304 = vmatpush.msra.mxu0 0.0
    %305 = vmatpush.msra.mxu0 0.0
    %306 = vmatpush.msra.mxu0 0.0
    %307 = vmatpush.msra.mxu0 0.0
    %308 = vmatpush.msra.mxu0 0.0
    %309 = vmatpush.msra.mxu0 0.0
    %310 = vmatpush.msra.mxu0 0.0
    %311 = vmatpush.msra.mxu0 0.0
    %312 = vmatpush.msra.mxu0 0.0
    %313 = vmatpush.msra.mxu0 %v296
    %314 = vmatmul.f32.gmra.mxu0 %v117
    %v315 = vpop.f32.mrf.mxu0
    %v316 = vadd.f32 %v294, %v315
    %317 = vdwg.mxu0
    %v318 = vld [vmem:[#allocation2 + $0x58] sm:$0xff]
    %v319 = vld [vmem:[#allocation2 + $0x60] sm:$0xff]
    %v320 = vld [vmem:[#allocation2 + $0x68] sm:$0xff]
    %v321 = vld [vmem:[#allocation2 + $0x70] sm:$0xff]
    %v322 = vld [vmem:[#allocation2 + $0x78] sm:$0xff]
    %v323 = vld [vmem:[#allocation2 + $0x80] sm:$0xff]
    %v324 = vld [vmem:[%s5 + $0x5] sm:$0x1]
    %v325 = vsel %vm236, %v291, 0.0
    %v326 = vrot.slane %v325, 4
    %v327 = vadd.f32 %v325, %v326
    %v328 = vrot.slane %v327, 2
    %v329 = vadd.f32 %v327, %v328
    %v330 = vrot.slane %v329, 1
    %v331 = vadd.f32 %v329, %v330
    %v332 = vmul.f32 %v331, %v58
    %v333 = vsub.f32 %v291, %v332
    %v334 = vmul.f32 %v333, %v333
    %v335 = vsel %vm236, %v334, 0.0
    %v336 = vrot.slane %v335, 4
    %v337 = vadd.f32 %v335, %v336
    %v338 = vrot.slane %v337, 2
    %v339 = vadd.f32 %v337, %v338
    %v340 = vrot.slane %v339, 1
    %v341 = vadd.f32 %v339, %v340
    %v342 = vmul.f32 %v341, %v58
    %v343 = vadd.f32 %v342, 1e-05
    %v344 = vrsqrt.pop %v343
    %v345 = vmul.f32 %v344, %v343
    %v346 = vmul.f32 %v345, %v344
    %v347 = vmul.f32 0.5, %v346
    %v348 = vsub.f32 1.5, %v347
    %v349 = vmul.f32 %v344, %v348
    %vm350 = vweird.f32 %v343
    %vm351 = vweird.f32 %v344
    %vm352 = vmor %vm350, %vm351
    %v353 = vsel %vm352, %v344, %v349
    %v354 = vmul.f32 %v333, %v353
    %v355 = vsel %vm236, %v316, 0.0
    %v356 = vrot.slane %v355, 4
    %v357 = vadd.f32 %v355, %v356
    %v358 = vrot.slane %v357, 2
    %v359 = vadd.f32 %v357, %v358
    %v360 = vrot.slane %v359, 1
    %v361 = vadd.f32 %v359, %v360
    %v362 = vmul.f32 %v361, %v58
    %v363 = vsub.f32 %v316, %v362
    %v364 = vmul.f32 %v363, %v363
    %v365 = vsel %vm236, %v364, 0.0
    %v366 = vrot.slane %v365, 4
    %v367 = vadd.f32 %v365, %v366
    %v368 = vrot.slane %v367, 2
    %v369 = vadd.f32 %v367, %v368
    %v370 = vrot.slane %v369, 1
    %v371 = vadd.f32 %v369, %v370
    %v372 = vmul.f32 %v371, %v58
    %v373 = vadd.f32 %v372, 1e-05
    %v374 = vrsqrt.pop %v373
    %v375 = vmul.f32 %v374, %v373
    %v376 = vmul.f32 %v375, %v374
    %v377 = vmul.f32 0.5, %v376
    %v378 = vsub.f32 1.5, %v377
    %v379 = vmul.f32 %v374, %v378
    %vm380 = vweird.f32 %v373
    %vm381 = vweird.f32 %v374
    %vm382 = vmor %vm380, %vm381
    %v383 = vsel %vm382, %v374, %v379
    %v384 = vmul.f32 %v363, %v383
    %v386 = vsel %vm236, %v384, 0
    %388 = vmatpush.msra.mxu0 0.0
    %389 = vmatpush.msra.mxu0 0.0
    %390 = vmatpush.msra.mxu0 0.0
    %391 = vmatpush.msra.mxu0 0.0
    %392 = vmatpush.msra.mxu0 0.0
    %393 = vmatpush.msra.mxu0 0.0
    %394 = vmatpush.msra.mxu0 0.0
    %395 = vmatpush.msra.mxu0 0.0
    %396 = vmatpush.msra.mxu0 0.0
    %397 = vmatpush.msra.mxu0 0.0
    %398 = vmatpush.msra.mxu0 0.0
    %399 = vmatpush.msra.mxu0 0.0
    %400 = vmatpush.msra.mxu0 0.0
    %401 = vmatpush.msra.mxu0 %v323
    %402 = vmatpush.msra.mxu0 %v322
    %403 = vmatpush.msra.mxu0 %v321
    %404 = vmatmul.f32.gmra.mxu0 %v386
    %v405 = vpop.f32.mrf.mxu0
    %v406 = vadd.f32 0.0, %v405
    %407 = vdwg.mxu0
    %v409 = vsel %vm236, %v354, 0
    %411 = vmatpush.msra.mxu0 0.0
    %412 = vmatpush.msra.mxu0 0.0
    %413 = vmatpush.msra.mxu0 0.0
    %414 = vmatpush.msra.mxu0 0.0
    %415 = vmatpush.msra.mxu0 0.0
    %416 = vmatpush.msra.mxu0 0.0
    %417 = vmatpush.msra.mxu0 0.0
    %418 = vmatpush.msra.mxu0 0.0
    %419 = vmatpush.msra.mxu0 0.0
    %420 = vmatpush.msra.mxu0 0.0
    %421 = vmatpush.msra.mxu0 0.0
    %422 = vmatpush.msra.mxu0 0.0
    %423 = vmatpush.msra.mxu0 0.0
    %424 = vmatpush.msra.mxu0 %v320
    %425 = vmatpush.msra.mxu0 %v319
    %426 = vmatpush.msra.mxu0 %v318
    %427 = vmatmul.f32.gmra.mxu0 %v409
    %v428 = vpop.f32.mrf.mxu0
    %v429 = vadd.f32 %v406, %v428
    %430 = vdwg.mxu0
    %v431 = vperm.slane %v324, 0
    %v432 = vadd.f32 %v429, %v431
    %vm433 = vcmask 48128
    %v434 = vsel %vm433, %v432, -inf
    %435 = vmax.xlane.f32.xlu0 %v434
    %v436 = vpop.xlane.xlu0 %435
    %v437 = vsub.f32 %v432, %v436
    %v438 = vmul.f32 %v437, 1.442695
    %v439 = vpow.pop %v438
    %v440 = vsel %vm433, %v439, 0.0
    %441 = vadd.xlane.f32.xlu0 %v440
    %v442 = vpop.xlane.xlu0 %441
    %v443 = vrcp.pop %v442
    %v444 = vmul.f32 %v439, %v443
    %445 = vst.msk [vmem:[#allocation5] sm:$0xff] %vm433, %v444
    // Predicated region
    $region30: #{actor_forward.1} parent=1 // pred_check
      _
    $region31: #{actor_forward.1} parent=1 // pred_check_branch
      %447 = sbr.rel (0) target = $region33
    $region32: #{actor_forward.1} parent=1 // pred_region
      %449 = vsyncadd [#allocation4], 0
      %s451 = sshll.u32 [#allocation5], 4
      %s452 = int_to_ptr.vmem [resolvable:$true] %s451
      %s453 = sshll.u32 %s6, 4
      %s454 = int_to_ptr.hbm [resolvable:$true] %s453
      %456 = dma.vmem_to_hbm [thread:$0]  %s452, 128, %s454, [#allocation4]
    $region33: #{actor_forward.1} parent=1 // pred_fallthru
      _
    // Predicated region
    $region34: #{actor_forward.1} parent=1 // pred_check
      _
    $region35: #{actor_forward.1} parent=1 // pred_check_branch
      %458 = sbr.rel (0) target = $region37
    $region36: #{actor_forward.1} parent=1 // pred_region
      %460 = dma.done [#allocation4], 128
    $region37: #{actor_forward.1} parent=1 // pred_fallthru
      _
    %461 = vsyncpa [#allocation3], 1
    %462 = vsyncpa [#allocation4], 1

</llo_original>
